<compile_context>
chip_gen: v7x
topology: tpu7x:2x2x1
jax: 0.10.0
libtpu: 0.0.40
codegen_flags: <defaults>
</compile_context>

<pallas_src>
import jax
import jax.numpy as jnp
from jax.experimental import pallas as pl
from jax.experimental.pallas import tpu as pltpu

# ----------------------------- config (small, matching the module) ----------
VOCAB = 50
EBD_DIM = 32               # self.ebd.embedding_dim
EBD_LEN = 8                # args.ebd_len
SEQ_FULL = 10              # raw token length (truncated to EBD_LEN)
KERNEL_NUM = 8             # args.kernel_num
KERNEL_SIZES = (3, 4, 5)   # args.kernel_size
FC_OUT = 64
BATCH = 2

assert EBD_LEN >= max(KERNEL_SIZES), "ebd_len must be >= max kernel size"

KS_MAX = max(KERNEL_SIZES)
C3K = len(KERNEL_SIZES) * KERNEL_NUM        # 24
N_SEQ = 2 * BATCH                           # both siamese branches stacked
ROWS = N_SEQ * EBD_LEN                      # 32 token rows
ROWS_PAD = ROWS + 8                         # room for the last im2col window


# ----------------------------- Pallas kernel --------------------------------
def _siamese_textcnn_kernel(ids_ref, emb_ref, wc_ref, bc_ref, wfc_ref, bfc_ref,
                            out_ref):
    """Single invocation; processes both siamese branches for the whole batch.

    ids_ref : (ROWS_PAD, 1) int32   flattened (branch, batch, pos) token ids,
                                    tail padded with -1 (gathers zero rows)
    emb_ref : (VOCAB, D)            embedding table (resident in VMEM)
    wc_ref  : (KS_MAX*D, 3K)        fused, zero-padded conv weights
    bc_ref  : (1, 3K)               fused conv bias
    wfc_ref : (3K, 64)              fc weight (pre-transposed from torch)
    bfc_ref : (1, 64)               fc bias
    out_ref : (B, 128)              out_1 | out_2 packed on the lane axis
    """
    L, D, K = EBD_LEN, EBD_DIM, KERNEL_NUM

    # ---- embedding gather as a one-hot matmul (no XLA gather, no HBM trip) --
    ids = ids_ref[...]                                            # (ROWS_PAD, 1)
    onehot = (ids == jax.lax.broadcasted_iota(
        jnp.int32, (ROWS_PAD, VOCAB), 1)).astype(jnp.float32)     # (ROWS_PAD, V)
    x = jnp.dot(onehot, emb_ref[...],
                preferred_element_type=jnp.float32)               # (ROWS_PAD, D)

    # ---- im2col: stack KS_MAX shifted copies along lanes -> (ROWS, 160) -----
    win = jnp.concatenate([x[s:s + ROWS, :] for s in range(KS_MAX)], axis=-1)

    # ---- all three convs as ONE matmul, fused bias + ReLU --------------------
    act = jnp.dot(win, wc_ref[...],
                  preferred_element_type=jnp.float32) + bc_ref[...]  # (ROWS, 3K)
    act = jnp.maximum(act, 0.0)

    # ---- mask window positions that run off their own sequence, then max ----
    act3 = act.reshape(N_SEQ, L, C3K)
    t = jax.lax.broadcasted_iota(jnp.int32, (N_SEQ, L, C3K), 1)   # in-seq pos
    col = jax.lax.broadcasted_iota(jnp.int32, (N_SEQ, L, C3K), 2)
    lv = jnp.where(col < K, L - KERNEL_SIZES[0] + 1,
                   jnp.where(col < 2 * K, L - KERNEL_SIZES[1] + 1,
                             L - KERNEL_SIZES[2] + 1))
    act3 = jnp.where(t < lv, act3, -jnp.inf)
    pooled = jnp.max(act3, axis=1)                                # (N_SEQ, 3K)

    # ---- fc ------------------------------------------------------------------
    fc = jnp.dot(pooled, wfc_ref[...],
                 preferred_element_type=jnp.float32) + bfc_ref[...]  # (N_SEQ, 64)
    # TODO(synk): nn.Dropout is identity in eval mode; training-mode dropout not implemented.

    # ---- pack both branches lane-dense: (B, 128) -----------------------------
    out_ref[...] = jnp.concatenate([fc[:BATCH], fc[BATCH:]], axis=-1)


def _fused_forward(ids, params):
    """ids: (ROWS_PAD, 1) int32 -> (B, 128) float32 via a single pallas_call."""
    full = lambda shape: pl.BlockSpec(shape, lambda i: (0,) * len(shape))
    return pl.pallas_call(
        _siamese_textcnn_kernel,
        out_shape=jax.ShapeDtypeStruct((BATCH, 2 * FC_OUT), jnp.float32),
        grid=(1,),
        in_specs=[
            full((ROWS_PAD, 1)),
            full((VOCAB, EBD_DIM)),
            full((KS_MAX * EBD_DIM, C3K)),
            full((1, C3K)),
            full((C3K, FC_OUT)),
            full((1, FC_OUT)),
        ],
        out_specs=full((BATCH, 2 * FC_OUT)),
        compiler_params=pltpu.CompilerParams(
            dimension_semantics=("arbitrary",)),
    )(ids, params["embedding"], params["wc_fused"], params["bc_fused"],
      params["wfc"], params["bfc"])


def model_g_forward(tokens_1, tokens_2, params):
    """Siamese forward: returns (out_1, out_2), each (B, 64)."""
    # truncate, stack both branches, flatten, pad to ROWS_PAD with -1 (no match)
    tok = jnp.concatenate(
        [tokens_1[:, :EBD_LEN], tokens_2[:, :EBD_LEN]], axis=0)   # (2B, L)
    ids = tok.reshape(-1).astype(jnp.int32)
    ids = jnp.pad(ids, (0, ROWS_PAD - ROWS),
                  constant_values=-1).reshape(ROWS_PAD, 1)
    out = _fused_forward(ids, params)                             # (B, 128)
    return out[:, :FC_OUT], out[:, FC_OUT:]


# ----------------------------- pure-JAX reference ----------------------------
def _ref_once(ebd_seq, params):
    B, L, D = ebd_seq.shape
    feats = []
    for w, b, ks in ((params["w1"], params["b1"], KERNEL_SIZES[0]),
                     (params["w2"], params["b2"], KERNEL_SIZES[1]),
                     (params["w3"], params["b3"], KERNEL_SIZES[2])):
        lv = L - ks + 1
        acc = jnp.zeros((B, lv, KERNEL_NUM), jnp.float32)
        for s in range(ks):
            acc = acc + jnp.einsum("bld,dk->blk", ebd_seq[:, s:s + lv, :], w[s])
        acc = jnp.maximum(acc + b[None], 0.0)
        feats.append(jnp.max(acc, axis=1))
    cat = jnp.concatenate(feats, axis=-1)
    return cat @ params["wfc"] + params["bfc"]


# ----------------------------- parameter init --------------------------------
def _fuse_conv_params(w_list, b_list):
    """Zero-pad the per-branch conv weights into one (ks_max*D, 3K) matrix."""
    wc = jnp.zeros((KS_MAX * EBD_DIM, C3K), jnp.float32)
    for i, (w, ks) in enumerate(zip(w_list, KERNEL_SIZES)):
        wc = wc.at[: ks * EBD_DIM, i * KERNEL_NUM:(i + 1) * KERNEL_NUM].set(
            w.reshape(ks * EBD_DIM, KERNEL_NUM))
    bc = jnp.concatenate([b.reshape(1, KERNEL_NUM) for b in b_list], axis=-1)
    return wc, bc


def init_params(key):
    ks = jax.random.split(key, 10)
    K, D = KERNEL_NUM, EBD_DIM
    ks1, ks2, ks3 = KERNEL_SIZES
    s = 0.1
    p = {
        "embedding": jax.random.normal(ks[0], (VOCAB, D), jnp.float32),
        # torch conv weight is (K, 1, ks, D); stored here pre-transposed to (ks, D, K)
        "w1": s * jax.random.normal(ks[1], (ks1, D, K), jnp.float32),
        "b1": s * jax.random.normal(ks[2], (1, K), jnp.float32),
        "w2": s * jax.random.normal(ks[3], (ks2, D, K), jnp.float32),
        "b2": s * jax.random.normal(ks[4], (1, K), jnp.float32),
        "w3": s * jax.random.normal(ks[5], (ks3, D, K), jnp.float32),
        "b3": s * jax.random.normal(ks[6], (1, K), jnp.float32),
        # torch fc weight is (64, 3K); stored pre-transposed to (3K, 64)
        "wfc": s * jax.random.normal(ks[7], (C3K, FC_OUT), jnp.float32),
        "bfc": s * jax.random.normal(ks[8], (1, FC_OUT), jnp.float32),
    }
    wc, bc = _fuse_conv_params([p["w1"], p["w2"], p["w3"]],
                               [p["b1"], p["b2"], p["b3"]])
    p["wc_fused"], p["bc_fused"] = wc, bc
    return p


if __name__ == "__main__":
    key = jax.random.PRNGKey(0)
    kp, k1, k2 = jax.random.split(key, 3)
    params = init_params(kp)

    tokens_1 = jax.random.randint(k1, (BATCH, SEQ_FULL), 0, VOCAB)
    tokens_2 = jax.random.randint(k2, (BATCH, SEQ_FULL), 0, VOCAB)

    fwd = jax.jit(model_g_forward)
    out_1, out_2 = fwd(tokens_1, tokens_2, params)
    jax.block_until_ready((out_1, out_2))

    # correctness check against pure-JAX reference
    emb = params["embedding"]
    ref_1 = _ref_once(jnp.take(emb, tokens_1, axis=0)[:, :EBD_LEN, :], params)
    ref_2 = _ref_once(jnp.take(emb, tokens_2, axis=0)[:, :EBD_LEN, :], params)
    assert out_1.shape == (BATCH, FC_OUT) and out_2.shape == (BATCH, FC_OUT)
    assert jnp.allclose(out_1, ref_1, atol=1e-4, rtol=1e-4)
    assert jnp.allclose(out_2, ref_2, atol=1e-4, rtol=1e-4)

    print("KERNEL_OK")
</pallas_src>

<mosaic_0001>
module attributes {stable_mosaic.version = 11 : i64} {
  func.func @_siamese_textcnn_kernel(%arg0: i32, %arg1: memref<40x1xi32, #tpu.memory_space<vmem>>, %arg2: memref<50x32xf32, #tpu.memory_space<vmem>>, %arg3: memref<160x24xf32, #tpu.memory_space<vmem>>, %arg4: memref<1x24xf32, #tpu.memory_space<vmem>>, %arg5: memref<24x64xf32, #tpu.memory_space<vmem>>, %arg6: memref<1x64xf32, #tpu.memory_space<vmem>>, %arg7: memref<2x128xf32, #tpu.memory_space<vmem>>) attributes {dimension_semantics = [#tpu.dimension_semantics<arbitrary>], iteration_bounds = array<i64: 1>, scalar_prefetch = 0 : i64, scratch_operands = 0 : i64, tpu.core_type = #tpu.core_type<tc>, window_params = [{pipeline_mode = #tpu.pipeline_mode<synchronous>, transform_indices = @transform_0, window_bounds = array<i64: 40, 1>}, {pipeline_mode = #tpu.pipeline_mode<synchronous>, transform_indices = @transform_1, window_bounds = array<i64: 50, 32>}, {pipeline_mode = #tpu.pipeline_mode<synchronous>, transform_indices = @transform_2, window_bounds = array<i64: 160, 24>}, {pipeline_mode = #tpu.pipeline_mode<synchronous>, transform_indices = @transform_3, window_bounds = array<i64: 1, 24>}, {pipeline_mode = #tpu.pipeline_mode<synchronous>, transform_indices = @transform_4, window_bounds = array<i64: 24, 64>}, {pipeline_mode = #tpu.pipeline_mode<synchronous>, transform_indices = @transform_5, window_bounds = array<i64: 1, 64>}, {pipeline_mode = #tpu.pipeline_mode<synchronous>, transform_indices = @transform_6, window_bounds = array<i64: 2, 128>}]} {
    %c0 = arith.constant 0 : index
    %c0_0 = arith.constant 0 : index
    %0 = vector.load %arg1[%c0, %c0_0] : memref<40x1xi32, #tpu.memory_space<vmem>>, vector<40x1xi32>
    %1 = tpu.iota {dimensions = array<i32: 1>} : vector<40x50xi32>
    %2 = vector.broadcast %0 : vector<40x1xi32> to vector<40x50xi32>
    %3 = arith.cmpi eq, %2, %1 : vector<40x50xi32>
    %4 = arith.extui %3 : vector<40x50xi1> to vector<40x50xi32>
    %5 = arith.sitofp %4 : vector<40x50xi32> to vector<40x50xf32>
    %c0_1 = arith.constant 0 : index
    %c0_2 = arith.constant 0 : index
    %6 = vector.load %arg2[%c0_1, %c0_2] : memref<50x32xf32, #tpu.memory_space<vmem>>, vector<50x32xf32>
    %cst = arith.constant dense<0.000000e+00> : vector<40x32xf32>
    %7 = tpu.matmul %5, %6, %cst {dimension_numbers = #tpu.dot_dimension_numbers<[1], [0], [0], [1], [0, 0, 1, 1], [], []>} : vector<40x50xf32>, vector<50x32xf32>, vector<40x32xf32> -> vector<40x32xf32>
    %8 = vector.extract_strided_slice %7 {offsets = [0, 0], sizes = [32, 32], strides = [1, 1]} : vector<40x32xf32> to vector<32x32xf32>
    %9 = vector.extract_strided_slice %7 {offsets = [1, 0], sizes = [32, 32], strides = [1, 1]} : vector<40x32xf32> to vector<32x32xf32>
    %10 = vector.extract_strided_slice %7 {offsets = [2, 0], sizes = [32, 32], strides = [1, 1]} : vector<40x32xf32> to vector<32x32xf32>
    %11 = vector.extract_strided_slice %7 {offsets = [3, 0], sizes = [32, 32], strides = [1, 1]} : vector<40x32xf32> to vector<32x32xf32>
    %12 = vector.extract_strided_slice %7 {offsets = [4, 0], sizes = [32, 32], strides = [1, 1]} : vector<40x32xf32> to vector<32x32xf32>
    %13 = tpu.concatenate %8, %9, %10, %11, %12 in 1 : vector<32x32xf32>, vector<32x32xf32>, vector<32x32xf32>, vector<32x32xf32>, vector<32x32xf32> -> vector<32x160xf32>
    %c0_3 = arith.constant 0 : index
    %c0_4 = arith.constant 0 : index
    %14 = vector.load %arg3[%c0_3, %c0_4] : memref<160x24xf32, #tpu.memory_space<vmem>>, vector<160x24xf32>
    %cst_5 = arith.constant dense<0.000000e+00> : vector<32x24xf32>
    %15 = tpu.matmul %13, %14, %cst_5 {dimension_numbers = #tpu.dot_dimension_numbers<[1], [0], [0], [1], [0, 0, 1, 1], [], []>} : vector<32x160xf32>, vector<160x24xf32>, vector<32x24xf32> -> vector<32x24xf32>
    %c0_6 = arith.constant 0 : index
    %c0_7 = arith.constant 0 : index
    %16 = vector.load %arg4[%c0_6, %c0_7] : memref<1x24xf32, #tpu.memory_space<vmem>>, vector<1x24xf32>
    %17 = vector.broadcast %16 : vector<1x24xf32> to vector<32x24xf32>
    %18 = arith.addf %15, %17 : vector<32x24xf32>
    %cst_8 = arith.constant 0.000000e+00 : f32
    %19 = vector.broadcast %cst_8 : f32 to vector<32x24xf32>
    %20 = arith.maximumf %18, %19 : vector<32x24xf32>
    %21 = vector.shape_cast %20 : vector<32x24xf32> to vector<4x8x24xf32>
    %22 = tpu.iota {dimensions = array<i32: 1>} : vector<4x8x24xi32>
    %23 = tpu.iota {dimensions = array<i32: 2>} : vector<4x8x24xi32>
    %c8_i32 = arith.constant 8 : i32
    %24 = vector.broadcast %c8_i32 : i32 to vector<4x8x24xi32>
    %25 = arith.cmpi slt, %23, %24 : vector<4x8x24xi32>
    %c16_i32 = arith.constant 16 : i32
    %26 = vector.broadcast %c16_i32 : i32 to vector<4x8x24xi32>
    %27 = arith.cmpi slt, %23, %26 : vector<4x8x24xi32>
    %c5_i32 = arith.constant 5 : i32
    %c4_i32 = arith.constant 4 : i32
    %28 = vector.broadcast %c5_i32 : i32 to vector<4x8x24xi32>
    %29 = vector.broadcast %c4_i32 : i32 to vector<4x8x24xi32>
    %30 = arith.select %27, %28, %29 : vector<4x8x24xi1>, vector<4x8x24xi32>
    %c6_i32 = arith.constant 6 : i32
    %31 = vector.broadcast %c6_i32 : i32 to vector<4x8x24xi32>
    %32 = arith.select %25, %31, %30 : vector<4x8x24xi1>, vector<4x8x24xi32>
    %33 = arith.cmpi slt, %22, %32 : vector<4x8x24xi32>
    %cst_9 = arith.constant 0xFF800000 : f32
    %34 = vector.broadcast %cst_9 : f32 to vector<4x8x24xf32>
    %35 = arith.select %33, %21, %34 : vector<4x8x24xi1>, vector<4x8x24xf32>
    %cst_10 = arith.constant dense<0xFF800000> : vector<4x24xf32>
    %36 = vector.multi_reduction <maximumf>, %35, %cst_10 [1] : vector<4x8x24xf32> to vector<4x24xf32>
    %c0_11 = arith.constant 0 : index
    %c0_12 = arith.constant 0 : index
    %37 = vector.load %arg5[%c0_11, %c0_12] : memref<24x64xf32, #tpu.memory_space<vmem>>, vector<24x64xf32>
    %cst_13 = arith.constant dense<0.000000e+00> : vector<4x64xf32>
    %38 = tpu.matmul %36, %37, %cst_13 {dimension_numbers = #tpu.dot_dimension_numbers<[1], [0], [0], [1], [0, 0, 1, 1], [], []>} : vector<4x24xf32>, vector<24x64xf32>, vector<4x64xf32> -> vector<4x64xf32>
    %c0_14 = arith.constant 0 : index
    %c0_15 = arith.constant 0 : index
    %39 = vector.load %arg6[%c0_14, %c0_15] : memref<1x64xf32, #tpu.memory_space<vmem>>, vector<1x64xf32>
    %40 = vector.broadcast %39 : vector<1x64xf32> to vector<4x64xf32>
    %41 = arith.addf %38, %40 : vector<4x64xf32>
    %42 = vector.extract_strided_slice %41 {offsets = [0, 0], sizes = [2, 64], strides = [1, 1]} : vector<4x64xf32> to vector<2x64xf32>
    %43 = vector.extract_strided_slice %41 {offsets = [2, 0], sizes = [2, 64], strides = [1, 1]} : vector<4x64xf32> to vector<2x64xf32>
    %44 = tpu.concatenate %42, %43 in 1 : vector<2x64xf32>, vector<2x64xf32> -> vector<2x128xf32>
    %c0_16 = arith.constant 0 : index
    %c0_17 = arith.constant 0 : index
    %45 = vector.load %arg7[%c0_16, %c0_17] : memref<2x128xf32, #tpu.memory_space<vmem>>, vector<2x128xf32>
    tpu.vector_store %arg7[%c0_16, %c0_17], %44 {strides = array<i32>} : memref<2x128xf32, #tpu.memory_space<vmem>>, vector<2x128xf32>,
    return
  }
  func.func @transform_0(%arg0: i32) -> (i32, i32) {
    %c0_i32 = arith.constant 0 : i32
    %c0_i32_0 = arith.constant 0 : i32
    %c0_i32_1 = arith.constant 0 : i32
    return %c0_i32, %c0_i32_0 : i32, i32
  }
  func.func @transform_1(%arg0: i32) -> (i32, i32) {
    %c0_i32 = arith.constant 0 : i32
    %c0_i32_0 = arith.constant 0 : i32
    %c0_i32_1 = arith.constant 0 : i32
    return %c0_i32, %c0_i32_0 : i32, i32
  }
  func.func @transform_2(%arg0: i32) -> (i32, i32) {
    %c0_i32 = arith.constant 0 : i32
    %c0_i32_0 = arith.constant 0 : i32
    %c0_i32_1 = arith.constant 0 : i32
    return %c0_i32, %c0_i32_0 : i32, i32
  }
  func.func @transform_3(%arg0: i32) -> (i32, i32) {
    %c0_i32 = arith.constant 0 : i32
    %c0_i32_0 = arith.constant 0 : i32
    %c0_i32_1 = arith.constant 0 : i32
    return %c0_i32, %c0_i32_0 : i32, i32
  }
  func.func @transform_4(%arg0: i32) -> (i32, i32) {
    %c0_i32 = arith.constant 0 : i32
    %c0_i32_0 = arith.constant 0 : i32
    %c0_i32_1 = arith.constant 0 : i32
    return %c0_i32, %c0_i32_0 : i32, i32
  }
  func.func @transform_5(%arg0: i32) -> (i32, i32) {
    %c0_i32 = arith.constant 0 : i32
    %c0_i32_0 = arith.constant 0 : i32
    %c0_i32_1 = arith.constant 0 : i32
    return %c0_i32, %c0_i32_0 : i32, i32
  }
  func.func @transform_6(%arg0: i32) -> (i32, i32) {
    %c0_i32 = arith.constant 0 : i32
    %c0_i32_0 = arith.constant 0 : i32
    %c0_i32_1 = arith.constant 0 : i32
    return %c0_i32, %c0_i32_0 : i32, i32
  }
}

</mosaic_0001>

<llo_original>
// kernel: model_g_forward.1
$region0: #{model_g_forward.1}
  #allocation0 [shape = 'u32[]', space=smem, size = 0x4, offset = 0x4, fixed_abs, tag = 'smem constant byte address 0x4 - core index']
  #allocation1 [shape = 'u32[144,128]{1,0:T(1,128)}', space=vmem, size = 0x12000, scoped, tag = 'internal scratch']
  %s0 = inlined_call_operand.vmem [shape: s32[40,1], index: 0, kind: input, shape index: {}]
  %s1 = inlined_call_operand.vmem [shape: f32[50,32], index: 1, kind: input, shape index: {}]
  %s2 = inlined_call_operand.vmem [shape: f32[160,24], index: 2, kind: input, shape index: {}]
  %s3 = inlined_call_operand.vmem [shape: f32[1,24], index: 3, kind: input, shape index: {}]
  %s4 = inlined_call_operand.vmem [shape: f32[24,64], index: 4, kind: input, shape index: {}]
  %s5 = inlined_call_operand.vmem [shape: f32[1,64], index: 5, kind: input, shape index: {}]
  %s6 = inlined_call_operand.vmem [shape: f32[2,128], index: 6, kind: output, shape index: {}]
  %s7 = sld [smem:[#allocation0]]
  $region34: #{model_g_forward.1} parent=0
    _
  %s9 = ssub.s32 1, %s7
  %s10 = scalar_select 0, %s9, %s7
  // Predicated region
  $region2: #{model_g_forward.1} parent=0 // pred_check
    _
  $region3: #{model_g_forward.1} parent=0 // pred_check_branch
    %12 = sbr.rel (0) target = $region5
  $region4: #{model_g_forward.1} parent=0 // pred_region
    _
  $region5: #{model_g_forward.1} parent=0 // pred_fallthru
    _
  // Predicated region
  $region6: #{model_g_forward.1} parent=0 // pred_check
    _
  $region7: #{model_g_forward.1} parent=0 // pred_check_branch
    %14 = sbr.rel (0) target = $region9
  $region8: #{model_g_forward.1} parent=0 // pred_region
    _
  $region9: #{model_g_forward.1} parent=0 // pred_fallthru
    _
  // Predicated region
  $region10: #{model_g_forward.1} parent=0 // pred_check
    _
  $region11: #{model_g_forward.1} parent=0 // pred_check_branch
    %16 = sbr.rel (0) target = $region13
  $region12: #{model_g_forward.1} parent=0 // pred_region
    _
  $region13: #{model_g_forward.1} parent=0 // pred_fallthru
    _
  // Predicated region
  $region14: #{model_g_forward.1} parent=0 // pred_check
    _
  $region15: #{model_g_forward.1} parent=0 // pred_check_branch
    %18 = sbr.rel (0) target = $region17
  $region16: #{model_g_forward.1} parent=0 // pred_region
    _
  $region17: #{model_g_forward.1} parent=0 // pred_fallthru
    _
  // Predicated region
  $region18: #{model_g_forward.1} parent=0 // pred_check
    _
  $region19: #{model_g_forward.1} parent=0 // pred_check_branch
    %20 = sbr.rel (0) target = $region21
  $region20: #{model_g_forward.1} parent=0 // pred_region
    _
  $region21: #{model_g_forward.1} parent=0 // pred_fallthru
    _
  // Predicated region
  $region22: #{model_g_forward.1} parent=0 // pred_check
    _
  $region23: #{model_g_forward.1} parent=0 // pred_check_branch
    %22 = sbr.rel (0) target = $region25
  $region24: #{model_g_forward.1} parent=0 // pred_region
    _
  $region25: #{model_g_forward.1} parent=0 // pred_fallthru
    _
  %v23 = vld [vmem:[%s0] sm:$0xff]
  %v24 = vld [vmem:[%s0 + $0x8] sm:$0xff]
  %v25 = vld [vmem:[%s0 + $0x10] sm:$0xff]
  %v26 = vld [vmem:[%s0 + $0x18] sm:$0xff]
  %v27 = vld [vmem:[%s0 + $0x20] sm:$0xff]
  %v28 = vlaneseq
  %v29 = vand.u32 %v28, 127
  %30 = vset.pattern.permute.xlu0 0
  %31 = vperm.xlu0 %30, %v23
  %v32 = vpop.permute.xlu0 %31
  %33 = vset.pattern.permute.xlu0 0
  %34 = vperm.xlu0 %33, %v24
  %v35 = vpop.permute.xlu0 %34
  %36 = vset.pattern.permute.xlu0 0
  %37 = vperm.xlu0 %36, %v25
  %v38 = vpop.permute.xlu0 %37
  %39 = vset.pattern.permute.xlu0 0
  %40 = vperm.xlu0 %39, %v26
  %v41 = vpop.permute.xlu0 %40
  %42 = vset.pattern.permute.xlu0 0
  %43 = vperm.xlu0 %42, %v27
  %v44 = vpop.permute.xlu0 %43
  %vm45 = vcmp.eq.s32.totalorder %v32, %v29
  %vm46 = vcmp.eq.s32.totalorder %v35, %v29
  %vm47 = vcmp.eq.s32.totalorder %v38, %v29
  %vm48 = vcmp.eq.s32.totalorder %v41, %v29
  %vm49 = vcmp.eq.s32.totalorder %v44, %v29
  %v50 = vsel %vm45, 1, 0
  %v51 = vsel %vm46, 1, 0
  %v52 = vsel %vm47, 1, 0
  %v53 = vsel %vm48, 1, 0
  %v54 = vsel %vm49, 1, 0
  %v55 = vcvt.s32.f32 %v50
  %v56 = vcvt.s32.f32 %v51
  %v57 = vcvt.s32.f32 %v52
  %v58 = vcvt.s32.f32 %v53
  %v59 = vcvt.s32.f32 %v54
  %v60 = vld [vmem:[%s1] sm:$0xff]
  %v61 = vld [vmem:[%s1 + $0x8] sm:$0xff]
  %v62 = vld [vmem:[%s1 + $0x10] sm:$0xff]
  %v63 = vld [vmem:[%s1 + $0x18] sm:$0xff]
  %v64 = vld [vmem:[%s1 + $0x20] sm:$0xff]
  %v65 = vld [vmem:[%s1 + $0x28] sm:$0xff]
  %v66 = vld [vmem:[%s1 + $0x30] sm:$0x3]
  %vm67 = vcmask 408576
  %v69 = vsel %vm67, %v55, 0
  %v72 = vsel %vm67, %v56, 0
  %v75 = vsel %vm67, %v57, 0
  %v78 = vsel %vm67, %v58, 0
  %v81 = vsel %vm67, %v59, 0
  %vm83 = vcmask 1041408
  %v85 = vsel %vm83, %v66, 0
  %87 = vmatprep.subr.mxu0 0.0
  %88 = vmatpush1.msra.mxu0 %v60
  %89 = vmatprep.subr.mxu0 0.0
  %90 = vmatpush1.msra.mxu0 %v61
  %91 = vmatprep.subr.mxu0 0.0
  %92 = vmatpush1.msra.mxu0 %v62
  %93 = vmatprep.subr.mxu0 0.0
  %94 = vmatpush1.msra.mxu0 %v63
  %95 = vmatprep.subr.mxu0 0.0
  %96 = vmatpush1.msra.mxu0 %v64
  %97 = vmatprep.subr.mxu0 0.0
  %98 = vmatpush1.msra.mxu0 %v65
  %99 = vmatprep.subr.mxu0 0.0
  %100 = vmatpush1.msra.mxu0 %v85
  %101 = vmatprep.subr.mxu0 0.0
  %102 = vmatpush1.msra.mxu0 0.0
  %103 = vmatprep.subr.mxu0 0.0
  %104 = vmatpush1.msra.mxu0 0.0
  %105 = vmatprep.subr.mxu0 0.0
  %106 = vmatpush1.msra.mxu0 0.0
  %107 = vmatprep.subr.mxu0 0.0
  %108 = vmatpush1.msra.mxu0 0.0
  %109 = vmatprep.subr.mxu0 0.0
  %110 = vmatpush1.msra.mxu0 0.0
  %111 = vmatprep.subr.mxu0 0.0
  %112 = vmatpush1.msra.mxu0 0.0
  %113 = vmatprep.subr.mxu0 0.0
  %114 = vmatpush1.msra.mxu0 0.0
  %115 = vmatprep.subr.mxu0 0.0
  %116 = vmatpush1.msra.mxu0 0.0
  %117 = vmatprep.subr.mxu0 0.0
  %118 = vmatpush1.msra.mxu0 0.0
  %119 = vmatprep.subr.mxu0 0.0
  %120 = vmatpush1.msra.mxu0 0.0
  %121 = vmatprep.subr.mxu0 0.0
  %122 = vmatpush1.msra.mxu0 0.0
  %123 = vmatprep.subr.mxu0 0.0
  %124 = vmatpush1.msra.mxu0 0.0
  %125 = vmatprep.subr.mxu0 0.0
  %126 = vmatpush1.msra.mxu0 0.0
  %127 = vmatprep.subr.mxu0 0.0
  %128 = vmatpush1.msra.mxu0 0.0
  %129 = vmatprep.subr.mxu0 0.0
  %130 = vmatpush1.msra.mxu0 0.0
  %131 = vmatprep.subr.mxu0 0.0
  %132 = vmatpush1.msra.mxu0 0.0
  %133 = vmatprep.subr.mxu0 0.0
  %134 = vmatpush1.msra.mxu0 0.0
  %135 = vmatprep.subr.mxu0 0.0
  %136 = vmatpush1.msra.mxu0 0.0
  %137 = vmatprep.subr.mxu0 0.0
  %138 = vmatpush1.msra.mxu0 0.0
  %139 = vmatprep.subr.mxu0 0.0
  %140 = vmatpush1.msra.mxu0 0.0
  %141 = vmatprep.subr.mxu0 0.0
  %142 = vmatpush1.msra.mxu0 0.0
  %143 = vmatprep.subr.mxu0 0.0
  %144 = vmatpush1.msra.mxu0 0.0
  %145 = vmatprep.subr.mxu0 0.0
  %146 = vmatpush1.msra.mxu0 0.0
  %147 = vmatprep.subr.mxu0 0.0
  %148 = vmatpush1.msra.mxu0 0.0
  %149 = vmatprep.subr.mxu0 0.0
  %150 = vmatpush1.msra.mxu0 0.0
  %151 = vmatprep.mubr.f32.mxu0 0.0
  %152 = vmatmul.mubr.f32.gmra.mrb[0].mxu0 %v69
  %v153 = vpop.f32.mrb[0].mxu0
  %v154 = vadd.f32 0.0, %v153
  %v155 = vpop.f32.mrb[0].mxu0
  %156 = vmatprep.mubr.f32.mxu0 0.0
  %157 = vmatmul.mubr.f32.gmra.mrb[0].mxu0 %v72
  %v158 = vpop.f32.mrb[0].mxu0
  %v159 = vadd.f32 0.0, %v158
  %v160 = vpop.f32.mrb[0].mxu0
  %161 = vmatprep.mubr.f32.mxu0 0.0
  %162 = vmatmul.mubr.f32.gmra.mrb[0].mxu0 %v75
  %v163 = vpop.f32.mrb[0].mxu0
  %v164 = vadd.f32 0.0, %v163
  %v165 = vpop.f32.mrb[0].mxu0
  %166 = vmatprep.mubr.f32.mxu0 0.0
  %167 = vmatmul.mubr.f32.gmra.mrb[0].mxu0 %v78
  %v168 = vpop.f32.mrb[0].mxu0
  %v169 = vadd.f32 0.0, %v168
  %v170 = vpop.f32.mrb[0].mxu0
  %171 = vmatprep.mubr.f32.mxu0 0.0
  %172 = vmatmul.mubr.f32.gmra.mrb[0].mxu0 %v81
  %v173 = vpop.f32.mrb[0].mxu0
  %v174 = vadd.f32 0.0, %v173
  %v175 = vpop.f32.mrb[0].mxu0
  %176 = vdwg.mxu0
  %vm182 = vcmask 1046528
  %v183 = vrot.slane %v154, 1
  %v184 = vrot.slane %v159, 1
  %v185 = vsel %vm182, %v183, %v184
  %v186 = vrot.slane %v164, 1
  %v187 = vsel %vm182, %v184, %v186
  %v188 = vrot.slane %v169, 1
  %v189 = vsel %vm182, %v186, %v188
  %v190 = vrot.slane %v174, 1
  %v191 = vsel %vm182, %v188, %v190
  %192 = vrot.lane.b32.xlu0 %v185, 32
  %v193 = vpop.permute.xlu0 %192
  %194 = vrot.lane.b32.xlu0 %v187, 32
  %v195 = vpop.permute.xlu0 %194
  %196 = vrot.lane.b32.xlu0 %v189, 32
  %v197 = vpop.permute.xlu0 %196
  %198 = vrot.lane.b32.xlu0 %v191, 32
  %v199 = vpop.permute.xlu0 %198
  %vm204 = vcmask 1045504
  %v205 = vrot.slane %v154, 2
  %v206 = vrot.slane %v159, 2
  %v207 = vsel %vm204, %v205, %v206
  %v208 = vrot.slane %v164, 2
  %v209 = vsel %vm204, %v206, %v208
  %v210 = vrot.slane %v169, 2
  %v211 = vsel %vm204, %v208, %v210
  %v212 = vrot.slane %v174, 2
  %v213 = vsel %vm204, %v210, %v212
  %214 = vrot.lane.b32.xlu0 %v207, 64
  %v215 = vpop.permute.xlu0 %214
  %216 = vrot.lane.b32.xlu0 %v209, 64
  %v217 = vpop.permute.xlu0 %216
  %218 = vrot.lane.b32.xlu0 %v211, 64
  %v219 = vpop.permute.xlu0 %218
  %220 = vrot.lane.b32.xlu0 %v213, 64
  %v221 = vpop.permute.xlu0 %220
  %vm226 = vcmask 1044480
  %v227 = vrot.slane %v154, 3
  %v228 = vrot.slane %v159, 3
  %v229 = vsel %vm226, %v227, %v228
  %v230 = vrot.slane %v164, 3
  %v231 = vsel %vm226, %v228, %v230
  %v232 = vrot.slane %v169, 3
  %v233 = vsel %vm226, %v230, %v232
  %v234 = vrot.slane %v174, 3
  %v235 = vsel %vm226, %v232, %v234
  %236 = vrot.lane.b32.xlu0 %v229, 96
  %v237 = vpop.permute.xlu0 %236
  %238 = vrot.lane.b32.xlu0 %v231, 96
  %v239 = vpop.permute.xlu0 %238
  %240 = vrot.lane.b32.xlu0 %v233, 96
  %v241 = vpop.permute.xlu0 %240
  %242 = vrot.lane.b32.xlu0 %v235, 96
  %v243 = vpop.permute.xlu0 %242
  %vm248 = vcmask 1043456
  %v249 = vrot.slane %v154, 4
  %v250 = vrot.slane %v159, 4
  %v251 = vsel %vm248, %v249, %v250
  %v252 = vrot.slane %v164, 4
  %v253 = vsel %vm248, %v250, %v252
  %v254 = vrot.slane %v169, 4
  %v255 = vsel %vm248, %v252, %v254
  %v256 = vrot.slane %v174, 4
  %v257 = vsel %vm248, %v254, %v256
  %vm258 = vcmask 261120
  %v259 = vsel %vm258, %v154, %v193
  %v260 = vsel %vm258, %v159, %v195
  %v261 = vsel %vm258, %v164, %v197
  %v262 = vsel %vm258, %v169, %v199
  %vm263 = vcmask 523264
  %v264 = vsel %vm263, %v259, %v215
  %v265 = vsel %vm263, %v260, %v217
  %v266 = vsel %vm263, %v261, %v219
  %v267 = vsel %vm263, %v262, %v221
  %vm268 = vcmask 785408
  %v269 = vsel %vm268, %v264, %v237
  %v270 = vsel %vm268, %v265, %v239
  %v271 = vsel %vm268, %v266, %v241
  %v272 = vsel %vm268, %v267, %v243
  %v273 = vld [vmem:[%s2] sm:$0xff]
  %v274 = vld [vmem:[%s2 + $0x8] sm:$0xff]
  %v275 = vld [vmem:[%s2 + $0x10] sm:$0xff]
  %v276 = vld [vmem:[%s2 + $0x18] sm:$0xff]
  %v277 = vld [vmem:[%s2 + $0x20] sm:$0xff]
  %v278 = vld [vmem:[%s2 + $0x28] sm:$0xff]
  %v279 = vld [vmem:[%s2 + $0x30] sm:$0xff]
  %v280 = vld [vmem:[%s2 + $0x38] sm:$0xff]
  %v281 = vld [vmem:[%s2 + $0x40] sm:$0xff]
  %v282 = vld [vmem:[%s2 + $0x48] sm:$0xff]
  %v283 = vld [vmem:[%s2 + $0x50] sm:$0xff]
  %v284 = vld [vmem:[%s2 + $0x58] sm:$0xff]
  %v285 = vld [vmem:[%s2 + $0x60] sm:$0xff]
  %v286 = vld [vmem:[%s2 + $0x68] sm:$0xff]
  %v287 = vld [vmem:[%s2 + $0x70] sm:$0xff]
  %v288 = vld [vmem:[%s2 + $0x78] sm:$0xff]
  %v289 = vld [vmem:[%s2 + $0x80] sm:$0xff]
  %v290 = vld [vmem:[%s2 + $0x88] sm:$0xff]
  %v291 = vld [vmem:[%s2 + $0x90] sm:$0xff]
  %v292 = vld [vmem:[%s2 + $0x98] sm:$0xff]
  %v293 = vld [vmem:[%s3] sm:$0x1]
  %v295 = vlaneseq
  %v296 = vshrl.u32 %v295, 7
  %v297 = vsub.s32 0, %v296
  %v298 = vrot.slane %v293, %v297
  %v300 = vsel %vm258, %v251, 0
  %v302 = vsel %vm258, %v253, 0
  %v304 = vsel %vm258, %v255, 0
  %v306 = vsel %vm258, %v257, 0
  %308 = vmatprep.subr.mxu0 0.0
  %309 = vmatpush1.msra.mxu0 %v273
  %310 = vmatprep.subr.mxu0 0.0
  %311 = vmatpush1.msra.mxu0 %v274
  %312 = vmatprep.subr.mxu0 0.0
  %313 = vmatpush1.msra.mxu0 %v275
  %314 = vmatprep.subr.mxu0 0.0
  %315 = vmatpush1.msra.mxu0 %v276
  %316 = vmatprep.subr.mxu0 0.0
  %317 = vmatpush1.msra.mxu0 %v277
  %318 = vmatprep.subr.mxu0 0.0
  %319 = vmatpush1.msra.mxu0 %v278
  %320 = vmatprep.subr.mxu0 0.0
  %321 = vmatpush1.msra.mxu0 %v279
  %322 = vmatprep.subr.mxu0 0.0
  %323 = vmatpush1.msra.mxu0 %v280
  %324 = vmatprep.subr.mxu0 0.0
  %325 = vmatpush1.msra.mxu0 %v281
  %326 = vmatprep.subr.mxu0 0.0
  %327 = vmatpush1.msra.mxu0 %v282
  %328 = vmatprep.subr.mxu0 0.0
  %329 = vmatpush1.msra.mxu0 %v283
  %330 = vmatprep.subr.mxu0 0.0
  %331 = vmatpush1.msra.mxu0 %v284
  %332 = vmatprep.subr.mxu0 0.0
  %333 = vmatpush1.msra.mxu0 %v285
  %334 = vmatprep.subr.mxu0 0.0
  %335 = vmatpush1.msra.mxu0 %v286
  %336 = vmatprep.subr.mxu0 0.0
  %337 = vmatpush1.msra.mxu0 %v287
  %338 = vmatprep.subr.mxu0 0.0
  %339 = vmatpush1.msra.mxu0 %v288
  %340 = vmatprep.subr.mxu0 0.0
  %341 = vmatpush1.msra.mxu0 %v289
  %342 = vmatprep.subr.mxu0 0.0
  %343 = vmatpush1.msra.mxu0 %v290
  %344 = vmatprep.subr.mxu0 0.0
  %345 = vmatpush1.msra.mxu0 %v291
  %346 = vmatprep.subr.mxu0 0.0
  %347 = vmatpush1.msra.mxu0 %v292
  %348 = vmatprep.subr.mxu0 0.0
  %349 = vmatpush1.msra.mxu0 0.0
  %350 = vmatprep.subr.mxu0 0.0
  %351 = vmatpush1.msra.mxu0 0.0
  %352 = vmatprep.subr.mxu0 0.0
  %353 = vmatpush1.msra.mxu0 0.0
  %354 = vmatprep.subr.mxu0 0.0
  %355 = vmatpush1.msra.mxu0 0.0
  %356 = vmatprep.subr.mxu0 0.0
  %357 = vmatpush1.msra.mxu0 0.0
  %358 = vmatprep.subr.mxu0 0.0
  %359 = vmatpush1.msra.mxu0 0.0
  %360 = vmatprep.subr.mxu0 0.0
  %361 = vmatpush1.msra.mxu0 0.0
  %362 = vmatprep.subr.mxu0 0.0
  %363 = vmatpush1.msra.mxu0 0.0
  %364 = vmatprep.subr.mxu0 0.0
  %365 = vmatpush1.msra.mxu0 0.0
  %366 = vmatprep.subr.mxu0 0.0
  %367 = vmatpush1.msra.mxu0 0.0
  %368 = vmatprep.subr.mxu0 0.0
  %369 = vmatpush1.msra.mxu0 0.0
  %370 = vmatprep.subr.mxu0 0.0
  %371 = vmatpush1.msra.mxu0 0.0
  %372 = vmatprep.mubr.f32.mxu0 %v300
  %373 = vmatmul.mubr.f32.gmra.mrb[0].mxu0 %v269
  %v374 = vpop.f32.mrb[0].mxu0
  %v375 = vadd.f32 %v298, %v374
  %v376 = vpop.f32.mrb[0].mxu0
  %377 = vmatprep.mubr.f32.mxu0 %v302
  %378 = vmatmul.mubr.f32.gmra.mrb[0].mxu0 %v270
  %v379 = vpop.f32.mrb[0].mxu0
  %v380 = vadd.f32 %v298, %v379
  %v381 = vpop.f32.mrb[0].mxu0
  %382 = vmatprep.mubr.f32.mxu0 %v304
  %383 = vmatmul.mubr.f32.gmra.mrb[0].mxu0 %v271
  %v384 = vpop.f32.mrb[0].mxu0
  %v385 = vadd.f32 %v298, %v384
  %v386 = vpop.f32.mrb[0].mxu0
  %387 = vmatprep.mubr.f32.mxu0 %v306
  %388 = vmatmul.mubr.f32.gmra.mrb[0].mxu0 %v272
  %v389 = vpop.f32.mrb[0].mxu0
  %v390 = vadd.f32 %v298, %v389
  %v391 = vpop.f32.mrb[0].mxu0
  %392 = vdwg.mxu0
  %v393 = vmax.f32 %v375, 0.0
  %v394 = vmax.f32 %v380, 0.0
  %v395 = vmax.f32 %v385, 0.0
  %v396 = vmax.f32 %v390, 0.0
  %v397 = vlaneseq
  %v398 = vshrl.u32 %v397, 7
  %vm399 = vcmp.lt.s32.totalorder %v29, 8
  %vm400 = vcmp.lt.s32.totalorder %v29, 16
  %v401 = vsel %vm400, 5, 4
  %v402 = vsel %vm399, 6, %v401
  %vm403 = vcmp.lt.s32.totalorder %v398, %v402
  %v404 = vsel %vm403, %v393, -inf
  %v405 = vsel %vm403, %v394, -inf
  %v406 = vsel %vm403, %v395, -inf
  %v407 = vsel %vm403, %v396, -inf
  %vm408 = vcmask 195584
  %v409 = vsel %vm408, %v404, -inf
  %v410 = vrot.slane %v409, 4
  %v411 = vmax.f32 %v409, %v410
  %v412 = vrot.slane %v411, 2
  %v413 = vmax.f32 %v411, %v412
  %v414 = vrot.slane %v413, 1
  %v415 = vmax.f32 %v413, %v414
  %v416 = vsel %vm408, %v405, -inf
  %v417 = vrot.slane %v416, 4
  %v418 = vmax.f32 %v416, %v417
  %v419 = vrot.slane %v418, 2
  %v420 = vmax.f32 %v418, %v419
  %v421 = vrot.slane %v420, 1
  %v422 = vmax.f32 %v420, %v421
  %v423 = vsel %vm408, %v406, -inf
  %v424 = vrot.slane %v423, 4
  %v425 = vmax.f32 %v423, %v424
  %v426 = vrot.slane %v425, 2
  %v427 = vmax.f32 %v425, %v426
  %v428 = vrot.slane %v427, 1
  %v429 = vmax.f32 %v427, %v428
  %v430 = vsel %vm408, %v407, -inf
  %v431 = vrot.slane %v430, 4
  %v432 = vmax.f32 %v430, %v431
  %v433 = vrot.slane %v432, 2
  %v434 = vmax.f32 %v432, %v433
  %v435 = vrot.slane %v434, 1
  %v436 = vmax.f32 %v434, %v435
  %v437 = vld [vmem:[%s4] sm:$0xff]
  %v438 = vld [vmem:[%s4 + $0x8] sm:$0xff]
  %v439 = vld [vmem:[%s4 + $0x10] sm:$0xff]
  %v440 = vld [vmem:[%s5] sm:$0x1]
  %v442 = vlaneseq
  %v443 = vshrl.u32 %v442, 7
  %v444 = vsub.s32 0, %v443
  %v445 = vrot.slane %v440, %v444
  %vm451 = vcmask 1041409
  %v452 = vsel %vm451, %v422, %v415
  %vm453 = vcmask 1042434
  %v454 = vsel %vm453, %v429, %v452
  %vm455 = vcmask 1043459
  %v456 = vsel %vm455, %v436, %v454
  %v457 = vsel %vm408, %v456, 0
  %459 = vmatprep.subr.mxu0 0.0
  %460 = vmatpush1.msra.mxu0 %v437
  %461 = vmatprep.subr.mxu0 0.0
  %462 = vmatpush1.msra.mxu0 %v438
  %463 = vmatprep.subr.mxu0 0.0
  %464 = vmatpush1.msra.mxu0 %v439
  %465 = vmatprep.subr.mxu0 0.0
  %466 = vmatpush1.msra.mxu0 0.0
  %467 = vmatprep.subr.mxu0 0.0
  %468 = vmatpush1.msra.mxu0 0.0
  %469 = vmatprep.subr.mxu0 0.0
  %470 = vmatpush1.msra.mxu0 0.0
  %471 = vmatprep.subr.mxu0 0.0
  %472 = vmatpush1.msra.mxu0 0.0
  %473 = vmatprep.subr.mxu0 0.0
  %474 = vmatpush1.msra.mxu0 0.0
  %475 = vmatprep.subr.mxu0 0.0
  %476 = vmatpush1.msra.mxu0 0.0
  %477 = vmatprep.subr.mxu0 0.0
  %478 = vmatpush1.msra.mxu0 0.0
  %479 = vmatprep.subr.mxu0 0.0
  %480 = vmatpush1.msra.mxu0 0.0
  %481 = vmatprep.subr.mxu0 0.0
  %482 = vmatpush1.msra.mxu0 0.0
  %483 = vmatprep.subr.mxu0 0.0
  %484 = vmatpush1.msra.mxu0 0.0
  %485 = vmatprep.subr.mxu0 0.0
  %486 = vmatpush1.msra.mxu0 0.0
  %487 = vmatprep.subr.mxu0 0.0
  %488 = vmatpush1.msra.mxu0 0.0
  %489 = vmatprep.subr.mxu0 0.0
  %490 = vmatpush1.msra.mxu0 0.0
  %491 = vmatprep.subr.mxu0 0.0
  %492 = vmatpush1.msra.mxu0 0.0
  %493 = vmatprep.subr.mxu0 0.0
  %494 = vmatpush1.msra.mxu0 0.0
  %495 = vmatprep.subr.mxu0 0.0
  %496 = vmatpush1.msra.mxu0 0.0
  %497 = vmatprep.subr.mxu0 0.0
  %498 = vmatpush1.msra.mxu0 0.0
  %499 = vmatprep.subr.mxu0 0.0
  %500 = vmatpush1.msra.mxu0 0.0
  %501 = vmatprep.subr.mxu0 0.0
  %502 = vmatpush1.msra.mxu0 0.0
  %503 = vmatprep.subr.mxu0 0.0
  %504 = vmatpush1.msra.mxu0 0.0
  %505 = vmatprep.subr.mxu0 0.0
  %506 = vmatpush1.msra.mxu0 0.0
  %507 = vmatprep.subr.mxu0 0.0
  %508 = vmatpush1.msra.mxu0 0.0
  %509 = vmatprep.subr.mxu0 0.0
  %510 = vmatpush1.msra.mxu0 0.0
  %511 = vmatprep.subr.mxu0 0.0
  %512 = vmatpush1.msra.mxu0 0.0
  %513 = vmatprep.subr.mxu0 0.0
  %514 = vmatpush1.msra.mxu0 0.0
  %515 = vmatprep.subr.mxu0 0.0
  %516 = vmatpush1.msra.mxu0 0.0
  %517 = vmatprep.subr.mxu0 0.0
  %518 = vmatpush1.msra.mxu0 0.0
  %519 = vmatprep.subr.mxu0 0.0
  %520 = vmatpush1.msra.mxu0 0.0
  %521 = vmatprep.subr.mxu0 0.0
  %522 = vmatpush1.msra.mxu0 0.0
  %523 = vmatprep.mubr.f32.mxu0 0.0
  %524 = vmatmul.mubr.f32.gmra.mrb[0].mxu0 %v457
  %v525 = vpop.f32.mrb[0].mxu0
  %v526 = vadd.f32 %v445, %v525
  %v527 = vpop.f32.mrb[0].mxu0
  %528 = vdwg.mxu0
  %v530 = vrot.slane %v526, 2
  %531 = vrot.lane.b32.xlu0 %v530, 64
  %v532 = vpop.permute.xlu0 %531
  %v534 = vsel %vm263, %v526, %v532
  %535 = vst [vmem:[%s6] sm:$0x3] %v534
  // Predicated region
  $region26: #{model_g_forward.1} parent=0 // pred_check
    _
  $region27: #{model_g_forward.1} parent=0 // pred_check_branch
    %537 = sbr.rel (0) target = $region29
  $region28: #{model_g_forward.1} parent=0 // pred_region
    _
  $region29: #{model_g_forward.1} parent=0 // pred_fallthru
    _
  // Predicated region
  $region30: #{model_g_forward.1} parent=0 // pred_check
    _
  $region31: #{model_g_forward.1} parent=0 // pred_check_branch
    %539 = sbr.rel (0) target = $region33
  $region32: #{model_g_forward.1} parent=0 // pred_region
    _
  $region33: #{model_g_forward.1} parent=0 // pred_fallthru
    _

</llo_original>
